<compile_context>
chip_gen: v7x
topology: tpu7x:2x2x1
jax: 0.10.0
libtpu: 0.0.40
codegen_flags: <defaults>
</compile_context>

<pallas_src>
import jax
import jax.numpy as jnp
from jax.experimental import pallas as pl
from jax.experimental.pallas import tpu as pltpu


def _round_up(x, m):
    return ((x + m - 1) // m) * m


def _mlp_head_kernel(u_ref, h_ref, w1_ref, b1_ref, w2_ref, b2_ref, o_ref):
    # u_ref/h_ref: (TB, E) f32    w1_ref: (2E, H) bf16    b1_ref: (1, H) f32
    # w2_ref:      (1, H) f32     b2_ref: (1, 1)  f32     o_ref:  (TB, 1) f32
    # Fused first layer: single K=2E bf16 matmul (f32 accumulation on the MXU).
    x = jnp.concatenate(
        [u_ref[...].astype(jnp.bfloat16), h_ref[...].astype(jnp.bfloat16)], axis=-1
    )
    h1 = jnp.dot(x, w1_ref[...], preferred_element_type=jnp.float32) + b1_ref[...]
    h1 = jnp.maximum(h1, 0.0)  # ReLU in f32 on the VPU
    # TODO(synk): Dropout(p=0.1) is identity in eval mode; training-mode dropout
    # (pltpu.prng_seed + pltpu.prng_random_bits mask/scale) is not implemented.
    # Second layer: (TB, H) @ (H, 1) would waste MXU pushes (N=1); VPU mul + lane reduce.
    out = jnp.sum(h1 * w2_ref[...], axis=-1, keepdims=True) + b2_ref[...]
    o_ref[...] = out.astype(o_ref.dtype)


def mlp_head_forward(u, h, w1, b1, w2, b2, *, block_rows=2048):
    """u, h: [B, E] float32. w1: [2E, H], b1: [1, H] or [H], w2: [H, 1], b2: [1, 1] or [1].
    Returns [B] float32 (matches `.squeeze(1)` of the PyTorch module in eval mode)."""
    B, E = u.shape
    twoE, H = w1.shape
    assert twoE == 2 * E and h.shape == (B, E)

    # Resident parameter blocks.  W1 lives in bf16 (native MXU operand); everything the
    # VPU touches stays f32.
    w1_bf = w1.astype(jnp.bfloat16)
    b1_row = b1.reshape(1, H).astype(jnp.float32)
    w2_row = w2.reshape(1, H).astype(jnp.float32)
    b2_s = b2.reshape(1, 1).astype(jnp.float32)

    # Batch tile: multiple of 8 (sublane), large enough to amortize per-step overhead,
    # capped so a 2-TC chip (v7x) still gets >= 2 balanced tiles when the batch allows.
    Bp8 = _round_up(B, 8)
    TB = min(_round_up(max(block_rows, 8), 8), Bp8)
    if Bp8 > 8:
        TB = min(TB, _round_up((Bp8 + 1) // 2, 8))
    Bp = _round_up(B, TB)
    if Bp != B:
        pad = Bp - B
        u = jnp.pad(u, ((0, pad), (0, 0)))
        h = jnp.pad(h, ((0, pad), (0, 0)))
    n_tiles = Bp // TB

    flops = 2 * Bp * (2 * E) * H + 3 * Bp * H
    bytes_accessed = (
        Bp * 2 * E * 4          # read u, h (f32)
        + 2 * E * H * 2         # W1 (bf16, resident)
        + (2 * H + 1) * 4       # b1, w2, b2 (f32, resident)
        + Bp * 4                # write output
    )

    out = pl.pallas_call(
        _mlp_head_kernel,
        out_shape=jax.ShapeDtypeStruct((Bp, 1), jnp.float32),
        grid_spec=pltpu.PrefetchScalarGridSpec(
            num_scalar_prefetch=0,
            grid=(n_tiles,),
            in_specs=[
                pl.BlockSpec((TB, E), lambda i: (i, 0)),      # u tile  (pipelined)
                pl.BlockSpec((TB, E), lambda i: (i, 0)),      # h tile  (pipelined)
                pl.BlockSpec((2 * E, H), lambda i: (0, 0)),   # W1      (resident, bf16)
                pl.BlockSpec((1, H), lambda i: (0, 0)),       # b1      (resident)
                pl.BlockSpec((1, H), lambda i: (0, 0)),       # w2 row  (resident)
                pl.BlockSpec((1, 1), lambda i: (0, 0)),       # b2      (resident)
            ],
            out_specs=pl.BlockSpec((TB, 1), lambda i: (i, 0)),
        ),
        compiler_params=pltpu.CompilerParams(
            dimension_semantics=("parallel",),     # megacore-shardable batch axis
            vmem_limit_bytes=32 * 1024 * 1024,     # safe on v5e/v6e/v7x; tiles are far smaller
        ),
        cost_estimate=pl.CostEstimate(
            flops=flops, transcendentals=0, bytes_accessed=bytes_accessed
        ),
    )(u, h, w1_bf, b1_row, w2_row, b2_s)
    return out[:B, 0]


def init_params(key, embed_dim, hid_dim=128):
    """Deterministic synthetic params; shapes match nn.Linear(2E,H) and nn.Linear(H,1)."""
    k1, k2, k3, k4 = jax.random.split(key, 4)
    in1 = embed_dim * 2
    bound1 = 1.0 / jnp.sqrt(in1)
    bound2 = 1.0 / jnp.sqrt(hid_dim)
    w1 = jax.random.uniform(k1, (in1, hid_dim), jnp.float32, -bound1, bound1)
    b1 = jax.random.uniform(k2, (1, hid_dim), jnp.float32, -bound1, bound1)
    w2 = jax.random.uniform(k3, (hid_dim, 1), jnp.float32, -bound2, bound2)
    b2 = jax.random.uniform(k4, (1, 1), jnp.float32, -bound2, bound2)
    return w1, b1, w2, b2


def _reference(u, h, w1, b1, w2, b2):
    x = jnp.concatenate([u, h], axis=1)
    return (jnp.maximum(x @ w1 + b1.reshape(1, -1), 0.0) @ w2 + b2.reshape(1, 1))[:, 0]


if __name__ == "__main__":
    EMBED_DIM = 32
    HID_DIM = 128

    key = jax.random.PRNGKey(0)
    ku, kh, kp = jax.random.split(key, 3)
    w1, b1, w2, b2 = init_params(kp, EMBED_DIM, HID_DIM)

    # Small batch (single tile).
    BATCH = 8
    u = jax.random.normal(ku, (BATCH, EMBED_DIM), jnp.float32)
    h = jax.random.normal(kh, (BATCH, EMBED_DIM), jnp.float32)
    out = mlp_head_forward(u, h, w1, b1, w2, b2)
    jax.block_until_ready(out)
    ref = _reference(u, h, w1, b1, w2, b2)
    assert out.shape == (BATCH,)
    # bf16 matmul operands (f32 accumulation) -> compare against the f32 reference loosely.
    assert jnp.allclose(out, ref, atol=5e-2, rtol=5e-2)

    # Ragged batch exercising the tiled + padded path (3 tiles of 128, last one partial).
    BATCH2 = 300
    ku2, kh2 = jax.random.split(jax.random.PRNGKey(1), 2)
    u2 = jax.random.normal(ku2, (BATCH2, EMBED_DIM), jnp.float32)
    h2 = jax.random.normal(kh2, (BATCH2, EMBED_DIM), jnp.float32)
    out2 = mlp_head_forward(u2, h2, w1, b1, w2, b2, block_rows=128)
    jax.block_until_ready(out2)
    ref2 = _reference(u2, h2, w1, b1, w2, b2)
    assert out2.shape == (BATCH2,)
    assert jnp.allclose(out2, ref2, atol=5e-2, rtol=5e-2)

    # Larger batch with the default tile size (exercises the >=2-balanced-tiles cap).
    BATCH3 = 3000
    ku3, kh3 = jax.random.split(jax.random.PRNGKey(2), 2)
    u3 = jax.random.normal(ku3, (BATCH3, EMBED_DIM), jnp.float32)
    h3 = jax.random.normal(kh3, (BATCH3, EMBED_DIM), jnp.float32)
    out3 = mlp_head_forward(u3, h3, w1, b1, w2, b2)
    jax.block_until_ready(out3)
    ref3 = _reference(u3, h3, w1, b1, w2, b2)
    assert out3.shape == (BATCH3,)
    assert jnp.allclose(out3, ref3, atol=5e-2, rtol=5e-2)

    print("KERNEL_OK")
</pallas_src>

<mosaic_0001>
module attributes {stable_mosaic.version = 11 : i64} {
  func.func @_mlp_head_kernel(%arg0: i32, %arg1: memref<8x32xf32, #tpu.memory_space<vmem>>, %arg2: memref<8x32xf32, #tpu.memory_space<vmem>>, %arg3: memref<64x128xbf16, #tpu.memory_space<vmem>>, %arg4: memref<1x128xf32, #tpu.memory_space<vmem>>, %arg5: memref<1x128xf32, #tpu.memory_space<vmem>>, %arg6: memref<1x1xf32, #tpu.memory_space<vmem>>, %arg7: memref<8x1xf32, #tpu.memory_space<vmem>>) attributes {dimension_semantics = [#tpu.dimension_semantics<parallel>], iteration_bounds = array<i64: 1>, scalar_prefetch = 0 : i64, scratch_operands = 0 : i64, tpu.core_type = #tpu.core_type<tc>, window_params = [{transform_indices = @transform_0, window_bounds = array<i64: 8, 32>}, {transform_indices = @transform_1, window_bounds = array<i64: 8, 32>}, {pipeline_mode = #tpu.pipeline_mode<synchronous>, transform_indices = @transform_2, window_bounds = array<i64: 64, 128>}, {pipeline_mode = #tpu.pipeline_mode<synchronous>, transform_indices = @transform_3, window_bounds = array<i64: 1, 128>}, {pipeline_mode = #tpu.pipeline_mode<synchronous>, transform_indices = @transform_4, window_bounds = array<i64: 1, 128>}, {pipeline_mode = #tpu.pipeline_mode<synchronous>, transform_indices = @transform_5, window_bounds = array<i64: 1, 1>}, {transform_indices = @transform_6, window_bounds = array<i64: 8, 1>}]} {
    %c0 = arith.constant 0 : index
    %c0_0 = arith.constant 0 : index
    %0 = vector.load %arg1[%c0, %c0_0] : memref<8x32xf32, #tpu.memory_space<vmem>>, vector<8x32xf32>
    %1 = arith.truncf %0 : vector<8x32xf32> to vector<8x32xbf16>
    %c0_1 = arith.constant 0 : index
    %c0_2 = arith.constant 0 : index
    %2 = vector.load %arg2[%c0_1, %c0_2] : memref<8x32xf32, #tpu.memory_space<vmem>>, vector<8x32xf32>
    %3 = arith.truncf %2 : vector<8x32xf32> to vector<8x32xbf16>
    %4 = tpu.concatenate %1, %3 in 1 : vector<8x32xbf16>, vector<8x32xbf16> -> vector<8x64xbf16>
    %c0_3 = arith.constant 0 : index
    %c0_4 = arith.constant 0 : index
    %5 = vector.load %arg3[%c0_3, %c0_4] : memref<64x128xbf16, #tpu.memory_space<vmem>>, vector<64x128xbf16>
    %cst = arith.constant dense<0.000000e+00> : vector<8x128xf32>
    %6 = tpu.matmul %4, %5, %cst {dimension_numbers = #tpu.dot_dimension_numbers<[1], [0], [0], [1], [0, 0, 1, 1], [], []>} : vector<8x64xbf16>, vector<64x128xbf16>, vector<8x128xf32> -> vector<8x128xf32>
    %c0_5 = arith.constant 0 : index
    %c0_6 = arith.constant 0 : index
    %7 = vector.load %arg4[%c0_5, %c0_6] : memref<1x128xf32, #tpu.memory_space<vmem>>, vector<1x128xf32>
    %8 = vector.broadcast %7 : vector<1x128xf32> to vector<8x128xf32>
    %9 = arith.addf %6, %8 : vector<8x128xf32>
    %cst_7 = arith.constant 0.000000e+00 : f32
    %10 = vector.broadcast %cst_7 : f32 to vector<8x128xf32>
    %11 = arith.maximumf %9, %10 : vector<8x128xf32>
    %c0_8 = arith.constant 0 : index
    %c0_9 = arith.constant 0 : index
    %12 = vector.load %arg5[%c0_8, %c0_9] : memref<1x128xf32, #tpu.memory_space<vmem>>, vector<1x128xf32>
    %13 = vector.broadcast %12 : vector<1x128xf32> to vector<8x128xf32>
    %14 = arith.mulf %11, %13 : vector<8x128xf32>
    %cst_10 = arith.constant dense<0.000000e+00> : vector<8xf32>
    %15 = vector.multi_reduction <add>, %14, %cst_10 [1] : vector<8x128xf32> to vector<8xf32>
    %16 = vector.shape_cast %15 : vector<8xf32> to vector<8x1xf32>
    %c0_11 = arith.constant 0 : index
    %c0_12 = arith.constant 0 : index
    %17 = vector.load %arg6[%c0_11, %c0_12] : memref<1x1xf32, #tpu.memory_space<vmem>>, vector<1x1xf32>
    %18 = vector.broadcast %17 : vector<1x1xf32> to vector<8x1xf32>
    %19 = arith.addf %16, %18 : vector<8x1xf32>
    %c0_13 = arith.constant 0 : index
    %c0_14 = arith.constant 0 : index
    %20 = vector.load %arg7[%c0_13, %c0_14] : memref<8x1xf32, #tpu.memory_space<vmem>>, vector<8x1xf32>
    tpu.vector_store %arg7[%c0_13, %c0_14], %19 {strides = array<i32>} : memref<8x1xf32, #tpu.memory_space<vmem>>, vector<8x1xf32>,
    return
  }
  func.func @transform_0(%arg0: i32) -> (i32, i32) {
    %c0_i32 = arith.constant 0 : i32
    %c0_i32_0 = arith.constant 0 : i32
    return %arg0, %c0_i32 : i32, i32
  }
  func.func @transform_1(%arg0: i32) -> (i32, i32) {
    %c0_i32 = arith.constant 0 : i32
    %c0_i32_0 = arith.constant 0 : i32
    return %arg0, %c0_i32 : i32, i32
  }
  func.func @transform_2(%arg0: i32) -> (i32, i32) {
    %c0_i32 = arith.constant 0 : i32
    %c0_i32_0 = arith.constant 0 : i32
    %c0_i32_1 = arith.constant 0 : i32
    return %c0_i32, %c0_i32_0 : i32, i32
  }
  func.func @transform_3(%arg0: i32) -> (i32, i32) {
    %c0_i32 = arith.constant 0 : i32
    %c0_i32_0 = arith.constant 0 : i32
    %c0_i32_1 = arith.constant 0 : i32
    return %c0_i32, %c0_i32_0 : i32, i32
  }
  func.func @transform_4(%arg0: i32) -> (i32, i32) {
    %c0_i32 = arith.constant 0 : i32
    %c0_i32_0 = arith.constant 0 : i32
    %c0_i32_1 = arith.constant 0 : i32
    return %c0_i32, %c0_i32_0 : i32, i32
  }
  func.func @transform_5(%arg0: i32) -> (i32, i32) {
    %c0_i32 = arith.constant 0 : i32
    %c0_i32_0 = arith.constant 0 : i32
    %c0_i32_1 = arith.constant 0 : i32
    return %c0_i32, %c0_i32_0 : i32, i32
  }
  func.func @transform_6(%arg0: i32) -> (i32, i32) {
    %c0_i32 = arith.constant 0 : i32
    %c0_i32_0 = arith.constant 0 : i32
    return %arg0, %c0_i32 : i32, i32
  }
}

</mosaic_0001>

<llo_original>
// kernel: tpu_custom_call.1
$region0: #{tpu_custom_call.1}
  #allocation0 [shape = 'u32[]', space=smem, size = 0x4, offset = 0x4, fixed_abs, tag = 'smem constant byte address 0x4 - core index']
  #allocation1 [shape = 'u32[144,128]{1,0:T(1,128)}', space=vmem, size = 0x12000, scoped, tag = 'internal scratch']
  #allocation2 [shape = 'f32[1,1]{1,0:T(1,128)S(1)}', space=vmem, size = 0x200, scoped, tag = 'scoped memory for tpu_custom_call.1']
  %s0 = inlined_call_operand.hbm [shape: f32[8,32], index: 0, kind: input, shape index: {}]
  %s1 = inlined_call_operand.hbm [shape: f32[8,32], index: 1, kind: input, shape index: {}]
  %s2 = inlined_call_operand.hbm [shape: bf16[64,128], index: 2, kind: input, shape index: {}]
  %s3 = inlined_call_operand.vmem [shape: f32[1,128], index: 3, kind: input, shape index: {}]
  %s4 = inlined_call_operand.vmem [shape: f32[1,128], index: 4, kind: input, shape index: {}]
  %s5 = inlined_call_operand.<no memory space> [shape: f32[1,1], index: 5, kind: input, shape index: {}]
  %s6 = inlined_call_operand.vmem [shape: f32[8,1], index: 6, kind: output, shape index: {}]
  %s7 = sld [smem:[#allocation0]]
  $region46: #{tpu_custom_call.1} parent=0
    _
  %s9 = ssub.s32 1, %s7
  %s10 = scalar_select 0, %s9, %s7
  %v11 = vstv %s5
  %12 = vst [vmem:[#allocation2] sm:$0x1] %v11
  $region1: #{tpu_custom_call.1} parent=0
    #allocation3 [shape = 'u8[4096]{0}', space=vmem, size = 0x1000, scoped, tag = 'input window, operand 0, single buffered']
    #allocation4 [shape = 's32[1]{0}', space=sflag, size = 0x4, scoped, tag = 'scoped memory for tpu_custom_call.1']
    #allocation5 [shape = 'u8[4096]{0}', space=vmem, size = 0x1000, scoped, tag = 'input window, operand 1, single buffered']
    #allocation6 [shape = 's32[1]{0}', space=sflag, size = 0x4, scoped, tag = 'scoped memory for tpu_custom_call.1']
    #allocation7 [shape = 'u8[16384]{0}', space=vmem, size = 0x4000, scoped, tag = 'input window, operand 2, single buffered']
    %13 = vsyncpa [#allocation4], 0
    %14 = vsyncpa [#allocation6], 0
    // Predicated region
    $region2: #{tpu_custom_call.1} parent=1 // pred_check
      _
    $region3: #{tpu_custom_call.1} parent=1 // pred_check_branch
      %16 = sbr.rel (0) target = $region5
    $region4: #{tpu_custom_call.1} parent=1 // pred_region
      %s18 = ssub.s32 128, 128
      %19 = vsyncadd [#allocation4], %s18
      %s21 = sshll.u32 [#allocation3], 4
      %s22 = int_to_ptr.vmem [resolvable:$true] %s21
      %24 = dma.hbm_to_vmem [thread:$0]  %s0, 128, %s22, [#allocation4]
    $region5: #{tpu_custom_call.1} parent=1 // pred_fallthru
      _
    // Predicated region
    $region6: #{tpu_custom_call.1} parent=1 // pred_check
      _
    $region7: #{tpu_custom_call.1} parent=1 // pred_check_branch
      %26 = sbr.rel (0) target = $region9
    $region8: #{tpu_custom_call.1} parent=1 // pred_region
      %s28 = ssub.s32 128, 128
      %29 = vsyncadd [#allocation6], %s28
      %s31 = sshll.u32 [#allocation5], 4
      %s32 = int_to_ptr.vmem [resolvable:$true] %s31
      %34 = dma.hbm_to_vmem [thread:$0]  %s1, 128, %s32, [#allocation6]
    $region9: #{tpu_custom_call.1} parent=1 // pred_fallthru
      _
    // Predicated region
    $region10: #{tpu_custom_call.1} parent=1 // pred_check
      _
    $region11: #{tpu_custom_call.1} parent=1 // pred_check_branch
      %36 = sbr.rel (0) target = $region13
    $region12: #{tpu_custom_call.1} parent=1 // pred_region
      %s38 = ssub.s32 512, 512
      %39 = vsyncadd [#allocation6], %s38
      %s40 = sshll.u32 [#allocation7], 4
      %s41 = int_to_ptr.vmem [resolvable:$true] %s40
      %46 = dma.hbm_to_vmem [thread:$0]  %s2, 512, %s41, [#allocation6], 64, 64, 4
    $region13: #{tpu_custom_call.1} parent=1 // pred_fallthru
      _
    // Predicated region
    $region14: #{tpu_custom_call.1} parent=1 // pred_check
      _
    $region15: #{tpu_custom_call.1} parent=1 // pred_check_branch
      %48 = sbr.rel (0) target = $region17
    $region16: #{tpu_custom_call.1} parent=1 // pred_region
      _
    $region17: #{tpu_custom_call.1} parent=1 // pred_fallthru
      _
    // Predicated region
    $region18: #{tpu_custom_call.1} parent=1 // pred_check
      _
    $region19: #{tpu_custom_call.1} parent=1 // pred_check_branch
      %50 = sbr.rel (0) target = $region21
    $region20: #{tpu_custom_call.1} parent=1 // pred_region
      _
    $region21: #{tpu_custom_call.1} parent=1 // pred_fallthru
      _
    // Predicated region
    $region22: #{tpu_custom_call.1} parent=1 // pred_check
      _
    $region23: #{tpu_custom_call.1} parent=1 // pred_check_branch
      %52 = sbr.rel (0) target = $region25
    $region24: #{tpu_custom_call.1} parent=1 // pred_region
      _
    $region25: #{tpu_custom_call.1} parent=1 // pred_fallthru
      _
    // Predicated region
    $region26: #{tpu_custom_call.1} parent=1 // pred_check
      _
    $region27: #{tpu_custom_call.1} parent=1 // pred_check_branch
      %54 = sbr.rel (0) target = $region29
    $region28: #{tpu_custom_call.1} parent=1 // pred_region
      %55 = dma.done [#allocation4], 128
    $region29: #{tpu_custom_call.1} parent=1 // pred_fallthru
      _
    // Predicated region
    $region30: #{tpu_custom_call.1} parent=1 // pred_check
      _
    $region31: #{tpu_custom_call.1} parent=1 // pred_check_branch
      %57 = sbr.rel (0) target = $region33
    $region32: #{tpu_custom_call.1} parent=1 // pred_region
      %58 = dma.done [#allocation6], 128
    $region33: #{tpu_custom_call.1} parent=1 // pred_fallthru
      _
    // Predicated region
    $region34: #{tpu_custom_call.1} parent=1 // pred_check
      _
    $region35: #{tpu_custom_call.1} parent=1 // pred_check_branch
      %60 = sbr.rel (0) target = $region37
    $region36: #{tpu_custom_call.1} parent=1 // pred_region
      %61 = dma.done [#allocation6], 512
    $region37: #{tpu_custom_call.1} parent=1 // pred_fallthru
      _
    %v63 = vld [vmem:[#allocation3] sm:$0xff]
    %v64 = vpack.c.bf16 %v63, %v63
    %v65 = vld [vmem:[#allocation5] sm:$0xff]
    %v66 = vpack.c.bf16 %v65, %v65
    %68 = vrot.lane.b32.xlu0 %v66, 32
    %v69 = vpop.permute.xlu0 %68
    %vm70 = vcmask 261120
    %v73 = vsel %vm70, %v64, %v69
    %v74 = vld [vmem:[#allocation7] sm:$0xf]
    %v75 = vld [vmem:[#allocation7 + $0x4] sm:$0xf]
    %v76 = vld [vmem:[#allocation7 + $0x8] sm:$0xf]
    %v77 = vld [vmem:[#allocation7 + $0xc] sm:$0xf]
    %v78 = vld [vmem:[#allocation7 + $0x10] sm:$0xf]
    %v79 = vld [vmem:[#allocation7 + $0x14] sm:$0xf]
    %v80 = vld [vmem:[#allocation7 + $0x18] sm:$0xf]
    %v81 = vld [vmem:[#allocation7 + $0x1c] sm:$0xf]
    %v82 = vld [vmem:[%s3] sm:$0x1]
    %v84 = vlaneseq
    %v85 = vshrl.u32 %v84, 7
    %v86 = vsub.s32 0, %v85
    %v87 = vrot.slane %v82, %v86
    %v97 = vunpack.c.l.b16 %v74
    %v98 = vunpack.c.l.b16 %v75
    %v99 = vunpack.c.l.b16 %v76
    %v100 = vunpack.c.l.b16 %v77
    %v101 = vunpack.c.l.b16 %v78
    %v102 = vunpack.c.l.b16 %v79
    %v103 = vunpack.c.l.b16 %v80
    %v104 = vunpack.c.l.b16 %v81
    %v105 = vpack.c.b16 %v98, %v97
    %v106 = vpack.c.b16 %v100, %v99
    %v107 = vpack.c.b16 %v102, %v101
    %v108 = vpack.c.b16 %v104, %v103
    %vm113 = vcmask 523264
    %v114 = vsel %vm113, %v73, 0
    %116 = vmatprep.subr.bf16.mxu0 0
    %117 = vmatpush1.bf16.msra.mxu0 %v105
    %118 = vmatprep.subr.bf16.mxu0 0
    %119 = vmatpush1.bf16.msra.mxu0 %v106
    %120 = vmatprep.subr.bf16.mxu0 0
    %121 = vmatpush1.bf16.msra.mxu0 %v107
    %122 = vmatprep.subr.bf16.mxu0 0
    %123 = vmatpush1.bf16.msra.mxu0 %v108
    %124 = vmatprep.subr.bf16.mxu0 0
    %125 = vmatpush1.bf16.msra.mxu0 0
    %126 = vmatprep.subr.bf16.mxu0 0
    %127 = vmatpush1.bf16.msra.mxu0 0
    %128 = vmatprep.subr.bf16.mxu0 0
    %129 = vmatpush1.bf16.msra.mxu0 0
    %130 = vmatprep.subr.bf16.mxu0 0
    %131 = vmatpush1.bf16.msra.mxu0 0
    %132 = vmatprep.subr.bf16.mxu0 0
    %133 = vmatpush1.bf16.msra.mxu0 0
    %134 = vmatprep.subr.bf16.mxu0 0
    %135 = vmatpush1.bf16.msra.mxu0 0
    %136 = vmatprep.subr.bf16.mxu0 0
    %137 = vmatpush1.bf16.msra.mxu0 0
    %138 = vmatprep.subr.bf16.mxu0 0
    %139 = vmatpush1.bf16.msra.mxu0 0
    %140 = vmatprep.subr.bf16.mxu0 0
    %141 = vmatpush1.bf16.msra.mxu0 0
    %142 = vmatprep.subr.bf16.mxu0 0
    %143 = vmatpush1.bf16.msra.mxu0 0
    %144 = vmatprep.subr.bf16.mxu0 0
    %145 = vmatpush1.bf16.msra.mxu0 0
    %146 = vmatprep.subr.bf16.mxu0 0
    %147 = vmatpush1.bf16.msra.mxu0 0
    %148 = vmatprep.mubr.bf16.mxu0 0
    %149 = vmatmul.mubr.bf16.gmra.mrb[0].mxu0 %v114
    %v150 = vpop.f32.mrb[0].mxu0
    %v151 = vadd.f32 %v87, %v150
    %v152 = vpop.f32.mrb[0].mxu0
    %v153 = vpop.f32.mrb[0].mxu0
    %v154 = vpop.f32.mrb[0].mxu0
    %155 = vdwg.mxu0
    %v156 = vmax.f32 %v151, 0.0
    %v157 = vld [vmem:[%s4] sm:$0x1]
    %v159 = vlaneseq
    %v160 = vshrl.u32 %v159, 7
    %v161 = vsub.s32 0, %v160
    %v162 = vrot.slane %v157, %v161
    %v164 = vmul.f32 %v156, %v162
    %165 = vadd.xlane.f32.xlu0 %v164
    %v166 = vpop.xlane.xlu0 %165
    %v167 = vld [vmem:[#allocation2] sm:$0x1]
    %v169 = vlaneseq
    %v170 = vshrl.u32 %v169, 7
    %v171 = vsub.s32 0, %v170
    %v172 = vrot.slane %v167, %v171
    %v174 = vadd.f32 %v166, %v172
    %vm175 = vcmask 7168
    %176 = vst.msk [vmem:[%s6] sm:$0xff] %vm175, %v174
    // Predicated region
    $region38: #{tpu_custom_call.1} parent=1 // pred_check
      _
    $region39: #{tpu_custom_call.1} parent=1 // pred_check_branch
      %178 = sbr.rel (0) target = $region41
    $region40: #{tpu_custom_call.1} parent=1 // pred_region
      _
    $region41: #{tpu_custom_call.1} parent=1 // pred_fallthru
      _
    // Predicated region
    $region42: #{tpu_custom_call.1} parent=1 // pred_check
      _
    $region43: #{tpu_custom_call.1} parent=1 // pred_check_branch
      %180 = sbr.rel (0) target = $region45
    $region44: #{tpu_custom_call.1} parent=1 // pred_region
      _
    $region45: #{tpu_custom_call.1} parent=1 // pred_fallthru
      _
    %181 = vsyncpa [#allocation4], 1
    %182 = vsyncpa [#allocation6], 1

</llo_original>
